<compile_context>
chip_gen: v7x
topology: tpu7x:2x2x1
jax: 0.10.0
libtpu: 0.0.40
codegen_flags: <defaults>
</compile_context>

<pallas_src>
import functools

import numpy as np
import jax
import jax.numpy as jnp
from jax import lax
from jax.experimental import pallas as pl
from jax.experimental.pallas import tpu as pltpu


# ----------------------------------------------------------------------------
# VMEM budget: <= 3/4 of the physical per-core VMEM (v7x: 48 MiB), <= 96 MiB on v5e/v6e.
# ----------------------------------------------------------------------------
def _vmem_limit_bytes():
    cap = 128 * 1024 * 1024
    try:
        cap = int(pltpu.get_tpu_info().vmem_capacity_bytes)
    except Exception:
        pass
    return min((cap * 3) // 4, 96 * 1024 * 1024)


# ----------------------------------------------------------------------------
# Kernel 1: level-blocked bidirectional child-sum TreeLSTM.
# grid = (direction, level); direction is 'parallel' (2 TCs on v7x), level is 'arbitrary'.
# ----------------------------------------------------------------------------
def tree_lstm_level_kernel(adj_ref, xiou_ref, uiou_ref, uf_ref, bf_ref,
                           h_out_ref, h_acc, fc_acc):
    """One (direction, level) step.

    adj_ref  : (1, LB, R)  bf16  this level's adjacency row slab over all permuted slots
    xiou_ref : (1, LB, 3H) f32   x @ W_iou + b_iou for this level's nodes (gate-lane aligned)
    h_acc    : (R, H)      bf16  final h of already-processed slots, 0 otherwise
    fc_acc   : (R, H)      bf16  sigmoid(U_f h + b_f) * c of processed slots, 0 otherwise
    h_out_ref: (1, LB, H)  f32   this level's final hidden states (written exactly once)
    """
    l = pl.program_id(1)
    lb = adj_ref.shape[1]
    hp = uf_ref.shape[0]

    @pl.when(l == 0)
    def _():
        h_acc[...] = jnp.zeros_like(h_acc)
        fc_acc[...] = jnp.zeros_like(fc_acc)

    adj_slab = adj_ref[0]                                          # (LB, R) bf16
    # child-sum aggregation restricted to this level's rows; bf16 x bf16 -> f32 MXU
    h_sum = jnp.dot(adj_slab, h_acc[...], preferred_element_type=jnp.float32)
    c_sum = jnp.dot(adj_slab, fc_acc[...], preferred_element_type=jnp.float32)

    iou = xiou_ref[0] + jnp.dot(h_sum, uiou_ref[...],
                                preferred_element_type=jnp.float32)
    # lane-aligned 128-wide gate blocks (hidden dim padded to 128)
    i_g = jax.nn.sigmoid(iou[:, 0 * hp:1 * hp])
    o_g = jax.nn.sigmoid(iou[:, 1 * hp:2 * hp])
    u_g = jnp.tanh(iou[:, 2 * hp:3 * hp])
    c_new = i_g * u_g + c_sum
    h_new = o_g * jnp.tanh(c_new)

    # per-child forget-gate contribution computed ONCE (when the node is finalized)
    f_new = jax.nn.sigmoid(
        jnp.dot(h_new, uf_ref[...], preferred_element_type=jnp.float32) + bf_ref[...])

    off = pl.multiple_of(l * lb, lb)                               # LB is a multiple of 16
    h_acc[pl.ds(off, lb), :] = h_new.astype(h_acc.dtype)
    fc_acc[pl.ds(off, lb), :] = (f_new * c_new).astype(fc_acc.dtype)

    h_out_ref[0] = h_new


# ----------------------------------------------------------------------------
# Kernel 2: lane-dense output tail -- shared output Linear (concat realized as two
# column-block matmuls) + FCResBlock + global node sum.
# ----------------------------------------------------------------------------
def encoder_tail_kernel(hf_ref, hb_ref, wof_ref, wob_ref, bcat_ref,
                        w1_ref, b1_ref, w2_ref, b2_ref,
                        state_ref, total_ref, *, n_valid):
    s0 = (jnp.dot(hf_ref[...], wof_ref[...], preferred_element_type=jnp.float32)
          + jnp.dot(hb_ref[...], wob_ref[...], preferred_element_type=jnp.float32)
          + bcat_ref[...])                                          # == cat([out_f, out_b])
    h1 = jnp.maximum(jnp.dot(s0, w1_ref[...],
                             preferred_element_type=jnp.float32) + b1_ref[...], 0.0)
    h2 = jnp.dot(h1, w2_ref[...], preferred_element_type=jnp.float32) + b2_ref[...]
    state = jnp.maximum(h2 + s0, 0.0)                               # FCResBlock

    # zero padded rows so they do not pollute the global sum (batch_gnn_ind=None path)
    row = lax.broadcasted_iota(jnp.int32, (state.shape[0], 1), 0)
    state = jnp.where(row < n_valid, state, 0.0)
    state_ref[...] = state
    total_ref[...] = jnp.sum(state, axis=0, keepdims=True)


# ----------------------------------------------------------------------------
# Forward wrapper.
# ----------------------------------------------------------------------------
def ground_truth_encoder_forward(params, adj, xiou_perm, pos, num_levels, lb, n, num_out):
    hp = params["U_f"].shape[0]          # padded hidden (128)
    op = params["W1"].shape[0]           # padded num_out (128)
    r = adj.shape[1]                     # num_levels * lb permuted slots
    vmem = _vmem_limit_bytes()

    h_all = pl.pallas_call(
        tree_lstm_level_kernel,
        out_shape=jax.ShapeDtypeStruct((2, r, hp), jnp.float32),
        grid_spec=pltpu.PrefetchScalarGridSpec(
            num_scalar_prefetch=0,
            grid=(2, num_levels),
            in_specs=[
                pl.BlockSpec((1, lb, r), lambda d, l: (d, l, 0)),        # adj slab (bf16)
                pl.BlockSpec((1, lb, 3 * hp), lambda d, l: (d, l, 0)),   # xiou slab
                pl.BlockSpec((hp, 3 * hp), lambda d, l: (0, 0)),         # U_iou (resident)
                pl.BlockSpec((hp, hp), lambda d, l: (0, 0)),             # U_f
                pl.BlockSpec((1, hp), lambda d, l: (0, 0)),              # b_f
            ],
            out_specs=pl.BlockSpec((1, lb, hp), lambda d, l: (d, l, 0)),
            scratch_shapes=[pltpu.VMEM((r, hp), jnp.bfloat16),           # h_acc
                            pltpu.VMEM((r, hp), jnp.bfloat16)]),         # fc_acc
        compiler_params=pltpu.CompilerParams(
            dimension_semantics=("parallel", "arbitrary"),
            vmem_limit_bytes=vmem),
    )(adj, xiou_perm, params["U_iou"], params["U_f"], params["b_f"])

    # Un-permute level-sorted slots back to original node order (tiny XLA gathers) and pad
    # node rows to a sublane multiple for the tail kernel.
    nr = max(8, ((n + 7) // 8) * 8)
    hf = jnp.zeros((nr, hp), jnp.float32).at[:n].set(jnp.take(h_all[0], pos[0], axis=0))
    hb = jnp.zeros((nr, hp), jnp.float32).at[:n].set(jnp.take(h_all[1], pos[1], axis=0))

    state_pad, total = pl.pallas_call(
        functools.partial(encoder_tail_kernel, n_valid=n),
        out_shape=(jax.ShapeDtypeStruct((nr, op), jnp.float32),
                   jax.ShapeDtypeStruct((1, op), jnp.float32)),
        compiler_params=pltpu.CompilerParams(vmem_limit_bytes=vmem),
    )(hf, hb, params["W_out_f"], params["W_out_b"], params["b_cat"],
      params["W1"], params["b1"], params["W2"], params["b2"])

    return state_pad[:n, :num_out], total[:, :num_out]


# ----------------------------------------------------------------------------
# Host-side parameter init (PyTorch nn.Linear-style uniform bounds) + lane-aligned padding.
# ----------------------------------------------------------------------------
def init_linear(key, fan_in, fan_out):
    k1, k2 = jax.random.split(key)
    bound = 1.0 / np.sqrt(fan_in)
    w = jax.random.uniform(k1, (fan_in, fan_out), jnp.float32, -bound, bound)
    b = jax.random.uniform(k2, (1, fan_out), jnp.float32, -bound, bound)
    return np.asarray(w), np.asarray(b)


def build_params(key, num_in, num_out, h_size, h_pad, out_pad):
    o_half = num_out // 2
    ks = jax.random.split(key, 6)
    W_iou, _ = init_linear(ks[0], num_in, 3 * h_size)     # DGL cell: W_iou/U_iou bias-free
    U_iou, _ = init_linear(ks[1], h_size, 3 * h_size)
    U_f, b_f = init_linear(ks[2], h_size, h_size)
    W_out, b_out = init_linear(ks[3], h_size, o_half)
    W1, b1 = init_linear(ks[4], num_out, num_out)
    W2, b2 = init_linear(ks[5], num_out, num_out)
    b_iou = np.zeros((1, 3 * h_size), np.float32)         # zero-init in DGL cell

    def pad2(w, rows, cols, r0=0, c0=0):
        out = np.zeros((rows, cols), np.float32)
        out[r0:r0 + w.shape[0], c0:c0 + w.shape[1]] = w
        return out

    def pad_gates(w, rows):
        # (in, 3*h_size) -> (rows, 3*h_pad): i/o/u gate blocks placed lane-aligned.
        return np.concatenate([pad2(w[:, g * h_size:(g + 1) * h_size], rows, h_pad)
                               for g in range(3)], axis=1)

    dev = {
        "U_iou": pad_gates(U_iou, h_pad),
        "U_f": pad2(U_f, h_pad, h_pad),
        "b_f": pad2(b_f, 1, h_pad),
        "W_out_f": pad2(W_out, h_pad, out_pad, 0, 0),       # forward half -> cols [0, O)
        "W_out_b": pad2(W_out, h_pad, out_pad, 0, o_half),  # backward half -> cols [O, 2O)
        "b_cat": pad2(np.concatenate([b_out, b_out], axis=1), 1, out_pad),
        "W1": pad2(W1, out_pad, out_pad), "b1": pad2(b1, 1, out_pad),
        "W2": pad2(W2, out_pad, out_pad), "b2": pad2(b2, 1, out_pad),
    }
    host = dict(W_iou=W_iou, b_iou=b_iou, U_iou=U_iou, U_f=U_f, b_f=b_f,
                W_out=W_out, b_out=b_out, W1=W1, b1=b1, W2=W2, b2=b2,
                h_size=h_size, h_pad=h_pad)
    return {k: jnp.asarray(v) for k, v in dev.items()}, host


def build_xiou_padded(x_np, host):
    """x @ W_iou + b_iou in the wrapper (x is one-hot -> effectively a row gather of W_iou),
    gate blocks placed lane-aligned into 3*h_pad columns."""
    hs, hp = host["h_size"], host["h_pad"]
    raw = x_np @ host["W_iou"] + host["b_iou"]                      # (N, 3*hs)
    out = np.zeros((x_np.shape[0], 3 * hp), np.float32)
    for g in range(3):
        out[:, g * hp:g * hp + hs] = raw[:, g * hs:(g + 1) * hs]
    return out


# ----------------------------------------------------------------------------
# Graph preprocessing: topological levels (replaces DGL prop_nodes_topo), level-sorted node
# permutation, per-level adjacency row slabs in bf16 (0/1 -> lossless).
# ----------------------------------------------------------------------------
def _topo_levels(edges, n):
    preds = [[] for _ in range(n)]        # preds[parent] = children aggregated by it
    for s, d in edges:
        preds[d].append(s)
    level = np.zeros(n, np.int64)
    for _ in range(n + 1):                # bounded relaxation (cycle guard)
        changed = False
        for i in range(n):
            if preds[i]:
                l = 1 + max(int(level[p]) for p in preds[i])
                if l != level[i]:
                    level[i] = l
                    changed = True
        if not changed:
            break
    else:
        raise ValueError("cycle detected in edge list")
    return level, preds


def build_graph_tensors(edges_fwd, n, xiou_np):
    edges_bwd = [(d, s) for (s, d) in edges_fwd]
    lv_f, ch_f = _topo_levels(edges_fwd, n)
    lv_b, ch_b = _topo_levels(edges_bwd, n)
    num_levels = int(max(lv_f.max(), lv_b.max())) + 1
    width = max(int(np.max(np.bincount(lv, minlength=num_levels)))
                for lv in (lv_f, lv_b))
    # LB: rows per level block. Multiple of 16 so bf16 accumulator slab writes stay
    # tile-aligned; bump toward 128/256 for thousand-node graphs (MXU-friendly M dim).
    lb = max(16, ((width + 15) // 16) * 16)
    r = num_levels * lb

    adj = np.zeros((2, r, r), np.float32)
    xperm = np.zeros((2, r, xiou_np.shape[1]), np.float32)
    pos = np.zeros((2, n), np.int32)                      # original node -> permuted slot
    for d, (lv, ch) in enumerate(((lv_f, ch_f), (lv_b, ch_b))):
        slot = np.zeros(n, np.int64)
        counts = [0] * num_levels
        for v in range(n):
            l = int(lv[v])
            slot[v] = l * lb + counts[l]
            counts[l] += 1
        for v in range(n):
            pos[d, v] = slot[v]
            xperm[d, slot[v]] = xiou_np[v]
            for u in ch[v]:
                adj[d, slot[v], slot[u]] = 1.0
    return (jnp.asarray(adj, jnp.bfloat16), jnp.asarray(xperm), jnp.asarray(pos),
            num_levels, lb)


# ----------------------------------------------------------------------------
# Pure-numpy f32 reference (original node order) for a loose correctness check.
# ----------------------------------------------------------------------------
def reference_forward(host, x_np, edges_fwd, n):
    hs = host["h_size"]

    def sigmoid(z):
        return 1.0 / (1.0 + np.exp(-z))

    def run_dir(edges):
        level, _ = _topo_levels(edges, n)
        A = np.zeros((n, n), np.float32)
        for s, d in edges:
            A[d, s] = 1.0
        h = np.zeros((n, hs), np.float32)
        c = np.zeros((n, hs), np.float32)
        xiou = x_np @ host["W_iou"] + host["b_iou"]
        for l in range(int(level.max()) + 1):
            h_sum = A @ h
            f = sigmoid(h @ host["U_f"] + host["b_f"])
            c_sum = A @ (f * c)
            iou = xiou + h_sum @ host["U_iou"]
            i = sigmoid(iou[:, :hs]); o = sigmoid(iou[:, hs:2 * hs]); u = np.tanh(iou[:, 2 * hs:])
            c_new = i * u + c_sum
            h_new = o * np.tanh(c_new)
            sel = (level == l)[:, None]
            h = np.where(sel, h_new, h)
            c = np.where(sel, c_new, c)
        return h

    hf = run_dir(edges_fwd)
    hb = run_dir([(d, s) for (s, d) in edges_fwd])
    cat = np.concatenate([hf @ host["W_out"] + host["b_out"],
                          hb @ host["W_out"] + host["b_out"]], axis=1)
    h1 = np.maximum(cat @ host["W1"] + host["b1"], 0.0)
    h2 = h1 @ host["W2"] + host["b2"]
    state = np.maximum(h2 + cat, 0.0)
    return state, state.sum(0, keepdims=True)


if __name__ == "__main__":
    # Small, module-consistent sizes: feature dim 8, num_out 32, h_size 32.
    num_in, num_out, nn_dim = 8, 32, 32
    H_PAD, OUT_PAD = 128, 128
    N = 10

    # Two trees batched into one graph (block-diagonal adjacency), like a DGL batch.
    #   tree A: 0 <- {1, 2}, 1 <- {3, 4}, 2 <- {5};  tree B: 6 <- {7, 8}, 8 <- {9}
    edges_fwd = [(3, 1), (4, 1), (5, 2), (1, 0), (2, 0),
                 (7, 6), (8, 6), (9, 8)]                 # child -> parent (leaves to root)
    gnn_ind = [0, 0, 0, 0, 0, 0, 1, 1, 1, 1]             # node -> formula index; with
    # batch_gnn_ind=None the per-formula scatter_add followed by sum(0, keepdim) collapses
    # into a single global node sum, so gnn_ind never enters the kernel.

    key = jax.random.PRNGKey(0)
    k_param, k_nodes = jax.random.split(key)
    params, host = build_params(k_param, num_in, num_out, nn_dim, H_PAD, OUT_PAD)

    # node features: one-hot node-type vectors of dimension num_in
    node_types = jax.random.randint(k_nodes, (N,), 0, num_in)
    x_np = np.asarray(jax.nn.one_hot(node_types, num_in, dtype=jnp.float32))

    xiou_np = build_xiou_padded(x_np, host)
    adj, xiou_perm, pos, num_levels, lb = build_graph_tensors(edges_fwd, N, xiou_np)

    state_tensor, out = ground_truth_encoder_forward(
        params, adj, xiou_perm, pos, num_levels, lb, N, num_out)
    state_tensor = jax.block_until_ready(state_tensor)
    out = jax.block_until_ready(out)

    assert state_tensor.shape == (N, num_out)
    assert out.shape == (1, num_out)
    assert np.all(np.isfinite(np.asarray(state_tensor)))
    assert np.all(np.isfinite(np.asarray(out)))

    # Loose check vs. f32 reference (child h / f*c aggregation path is rounded to bf16).
    ref_state, ref_out = reference_forward(host, x_np, edges_fwd, N)
    err_s = float(np.max(np.abs(np.asarray(state_tensor) - ref_state)))
    err_o = float(np.max(np.abs(np.asarray(out) - ref_out)))
    assert err_s < 1e-1 and err_o < 5e-1, (err_s, err_o)

    print("KERNEL_OK")
</pallas_src>

<mosaic_0001>
module attributes {stable_mosaic.version = 11 : i64} {
  func.func @tree_lstm_level_kernel(%arg0: i32, %arg1: i32, %arg2: memref<1x16x48xbf16, #tpu.memory_space<vmem>>, %arg3: memref<1x16x384xf32, #tpu.memory_space<vmem>>, %arg4: memref<128x384xf32, #tpu.memory_space<vmem>>, %arg5: memref<128x128xf32, #tpu.memory_space<vmem>>, %arg6: memref<1x128xf32, #tpu.memory_space<vmem>>, %arg7: memref<1x16x128xf32, #tpu.memory_space<vmem>>, %arg8: memref<48x128xbf16, #tpu.memory_space<vmem>>, %arg9: memref<48x128xbf16, #tpu.memory_space<vmem>>) attributes {dimension_semantics = [#tpu.dimension_semantics<parallel>, #tpu.dimension_semantics<arbitrary>], iteration_bounds = array<i64: 2, 3>, scalar_prefetch = 0 : i64, scratch_operands = 2 : i64, tpu.core_type = #tpu.core_type<tc>, window_params = [{transform_indices = @transform_0, window_bounds = array<i64: 1, 16, 48>}, {transform_indices = @transform_1, window_bounds = array<i64: 1, 16, 384>}, {pipeline_mode = #tpu.pipeline_mode<synchronous>, transform_indices = @transform_2, window_bounds = array<i64: 128, 384>}, {pipeline_mode = #tpu.pipeline_mode<synchronous>, transform_indices = @transform_3, window_bounds = array<i64: 128, 128>}, {pipeline_mode = #tpu.pipeline_mode<synchronous>, transform_indices = @transform_4, window_bounds = array<i64: 1, 128>}, {transform_indices = @transform_5, window_bounds = array<i64: 1, 16, 128>}]} {
    %c0_i32 = arith.constant 0 : i32
    %0 = arith.cmpi eq, %arg1, %c0_i32 : i32
    %1 = arith.extui %0 : i1 to i32
    %c0_i32_0 = arith.constant 0 : i32
    %2 = arith.cmpi ne, %1, %c0_i32_0 : i32
    scf.if %2 {
      %cst_27 = arith.constant 0.000000e+00 : bf16
      %54 = vector.broadcast %cst_27 : bf16 to vector<48x128xbf16>
      %c0_28 = arith.constant 0 : index
      %c0_29 = arith.constant 0 : index
      %55 = vector.load %arg8[%c0_28, %c0_29] : memref<48x128xbf16, #tpu.memory_space<vmem>>, vector<48x128xbf16>
      tpu.vector_store %arg8[%c0_28, %c0_29], %54 {strides = array<i32>} : memref<48x128xbf16, #tpu.memory_space<vmem>>, vector<48x128xbf16>,
      %cst_30 = arith.constant 0.000000e+00 : bf16
      %56 = vector.broadcast %cst_30 : bf16 to vector<48x128xbf16>
      %c0_31 = arith.constant 0 : index
      %c0_32 = arith.constant 0 : index
      %57 = vector.load %arg9[%c0_31, %c0_32] : memref<48x128xbf16, #tpu.memory_space<vmem>>, vector<48x128xbf16>
      tpu.vector_store %arg9[%c0_31, %c0_32], %56 {strides = array<i32>} : memref<48x128xbf16, #tpu.memory_space<vmem>>, vector<48x128xbf16>,
    } else {
    }
    %c0 = arith.constant 0 : index
    %c0_1 = arith.constant 0 : index
    %c0_2 = arith.constant 0 : index
    %3 = vector.load %arg2[%c0, %c0_1, %c0_2] : memref<1x16x48xbf16, #tpu.memory_space<vmem>>, vector<1x16x48xbf16>
    %4 = vector.shape_cast %3 : vector<1x16x48xbf16> to vector<16x48xbf16>
    %c0_3 = arith.constant 0 : index
    %c0_4 = arith.constant 0 : index
    %5 = vector.load %arg8[%c0_3, %c0_4] : memref<48x128xbf16, #tpu.memory_space<vmem>>, vector<48x128xbf16>
    %cst = arith.constant dense<0.000000e+00> : vector<16x128xf32>
    %6 = tpu.matmul %4, %5, %cst {dimension_numbers = #tpu.dot_dimension_numbers<[1], [0], [0], [1], [0, 0, 1, 1], [], []>} : vector<16x48xbf16>, vector<48x128xbf16>, vector<16x128xf32> -> vector<16x128xf32>
    %c0_5 = arith.constant 0 : index
    %c0_6 = arith.constant 0 : index
    %7 = vector.load %arg9[%c0_5, %c0_6] : memref<48x128xbf16, #tpu.memory_space<vmem>>, vector<48x128xbf16>
    %cst_7 = arith.constant dense<0.000000e+00> : vector<16x128xf32>
    %8 = tpu.matmul %4, %7, %cst_7 {dimension_numbers = #tpu.dot_dimension_numbers<[1], [0], [0], [1], [0, 0, 1, 1], [], []>} : vector<16x48xbf16>, vector<48x128xbf16>, vector<16x128xf32> -> vector<16x128xf32>
    %c0_8 = arith.constant 0 : index
    %c0_9 = arith.constant 0 : index
    %c0_10 = arith.constant 0 : index
    %9 = vector.load %arg3[%c0_8, %c0_9, %c0_10] : memref<1x16x384xf32, #tpu.memory_space<vmem>>, vector<1x16x384xf32>
    %10 = vector.shape_cast %9 : vector<1x16x384xf32> to vector<16x384xf32>
    %c0_11 = arith.constant 0 : index
    %c0_12 = arith.constant 0 : index
    %11 = vector.load %arg4[%c0_11, %c0_12] : memref<128x384xf32, #tpu.memory_space<vmem>>, vector<128x384xf32>
    %cst_13 = arith.constant dense<0.000000e+00> : vector<16x384xf32>
    %12 = tpu.matmul %6, %11, %cst_13 {dimension_numbers = #tpu.dot_dimension_numbers<[1], [0], [0], [1], [0, 0, 1, 1], [], []>} : vector<16x128xf32>, vector<128x384xf32>, vector<16x384xf32> -> vector<16x384xf32>
    %13 = arith.addf %10, %12 : vector<16x384xf32>
    %14 = vector.extract_strided_slice %13 {offsets = [0, 0], sizes = [16, 128], strides = [1, 1]} : vector<16x384xf32> to vector<16x128xf32>
    %15 = arith.negf %14 : vector<16x128xf32>
    %16 = math.exp %15 : vector<16x128xf32>
    %cst_14 = arith.constant 1.000000e+00 : f32
    %17 = vector.broadcast %cst_14 : f32 to vector<16x128xf32>
    %18 = arith.addf %17, %16 : vector<16x128xf32>
    %19 = arith.divf %17, %18 : vector<16x128xf32>
    %20 = vector.extract_strided_slice %13 {offsets = [0, 128], sizes = [16, 128], strides = [1, 1]} : vector<16x384xf32> to vector<16x128xf32>
    %21 = arith.negf %20 : vector<16x128xf32>
    %22 = math.exp %21 : vector<16x128xf32>
    %cst_15 = arith.constant 1.000000e+00 : f32
    %23 = vector.broadcast %cst_15 : f32 to vector<16x128xf32>
    %24 = arith.addf %23, %22 : vector<16x128xf32>
    %25 = arith.divf %23, %24 : vector<16x128xf32>
    %26 = vector.extract_strided_slice %13 {offsets = [0, 256], sizes = [16, 128], strides = [1, 1]} : vector<16x384xf32> to vector<16x128xf32>
    %27 = math.tanh %26 : vector<16x128xf32>
    %28 = arith.mulf %19, %27 : vector<16x128xf32>
    %29 = arith.addf %28, %8 : vector<16x128xf32>
    %30 = math.tanh %29 : vector<16x128xf32>
    %31 = arith.mulf %25, %30 : vector<16x128xf32>
    %c0_16 = arith.constant 0 : index
    %c0_17 = arith.constant 0 : index
    %32 = vector.load %arg5[%c0_16, %c0_17] : memref<128x128xf32, #tpu.memory_space<vmem>>, vector<128x128xf32>
    %cst_18 = arith.constant dense<0.000000e+00> : vector<16x128xf32>
    %33 = tpu.matmul %31, %32, %cst_18 {dimension_numbers = #tpu.dot_dimension_numbers<[1], [0], [0], [1], [0, 0, 1, 1], [], []>} : vector<16x128xf32>, vector<128x128xf32>, vector<16x128xf32> -> vector<16x128xf32>
    %c0_19 = arith.constant 0 : index
    %c0_20 = arith.constant 0 : index
    %34 = vector.load %arg6[%c0_19, %c0_20] : memref<1x128xf32, #tpu.memory_space<vmem>>, vector<1x128xf32>
    %35 = vector.broadcast %34 : vector<1x128xf32> to vector<16x128xf32>
    %36 = arith.addf %33, %35 : vector<16x128xf32>
    %37 = arith.negf %36 : vector<16x128xf32>
    %38 = math.exp %37 : vector<16x128xf32>
    %cst_21 = arith.constant 1.000000e+00 : f32
    %39 = vector.broadcast %cst_21 : f32 to vector<16x128xf32>
    %40 = arith.addf %39, %38 : vector<16x128xf32>
    %41 = arith.divf %39, %40 : vector<16x128xf32>
    %c16_i32 = arith.constant 16 : i32
    %42 = arith.muli %arg1, %c16_i32 : i32
    %43 = tpu.assume_multiple %42, 16 : i32
    %44 = arith.truncf %31 : vector<16x128xf32> to vector<16x128xbf16>
    %45 = arith.index_cast %43 : i32 to index
    %c0_22 = arith.constant 0 : index
    %46 = vector.load %arg8[%45, %c0_22] : memref<48x128xbf16, #tpu.memory_space<vmem>>, vector<16x128xbf16>
    tpu.vector_store %arg8[%45, %c0_22], %44 {strides = array<i32>} : memref<48x128xbf16, #tpu.memory_space<vmem>>, vector<16x128xbf16>,
    %47 = arith.mulf %41, %29 : vector<16x128xf32>
    %48 = arith.truncf %47 : vector<16x128xf32> to vector<16x128xbf16>
    %49 = arith.index_cast %43 : i32 to index
    %c0_23 = arith.constant 0 : index
    %50 = vector.load %arg9[%49, %c0_23] : memref<48x128xbf16, #tpu.memory_space<vmem>>, vector<16x128xbf16>
    tpu.vector_store %arg9[%49, %c0_23], %48 {strides = array<i32>} : memref<48x128xbf16, #tpu.memory_space<vmem>>, vector<16x128xbf16>,
    %c0_24 = arith.constant 0 : index
    %c0_25 = arith.constant 0 : index
    %c0_26 = arith.constant 0 : index
    %51 = vector.load %arg7[%c0_24, %c0_25, %c0_26] : memref<1x16x128xf32, #tpu.memory_space<vmem>>, vector<1x16x128xf32>
    %52 = vector.shape_cast %51 : vector<1x16x128xf32> to vector<16x128xf32>
    %53 = vector.shape_cast %31 : vector<16x128xf32> to vector<1x16x128xf32>
    tpu.vector_store %arg7[%c0_24, %c0_25, %c0_26], %53 {strides = array<i32>} : memref<1x16x128xf32, #tpu.memory_space<vmem>>, vector<1x16x128xf32>,
    return
  }
  func.func @transform_0(%arg0: i32, %arg1: i32) -> (i32, i32, i32) {
    %c0_i32 = arith.constant 0 : i32
    %c0_i32_0 = arith.constant 0 : i32
    return %arg0, %arg1, %c0_i32 : i32, i32, i32
  }
  func.func @transform_1(%arg0: i32, %arg1: i32) -> (i32, i32, i32) {
    %c0_i32 = arith.constant 0 : i32
    %c0_i32_0 = arith.constant 0 : i32
    return %arg0, %arg1, %c0_i32 : i32, i32, i32
  }
  func.func @transform_2(%arg0: i32, %arg1: i32) -> (i32, i32) {
    %c0_i32 = arith.constant 0 : i32
    %c0_i32_0 = arith.constant 0 : i32
    %c0_i32_1 = arith.constant 0 : i32
    return %c0_i32, %c0_i32_0 : i32, i32
  }
  func.func @transform_3(%arg0: i32, %arg1: i32) -> (i32, i32) {
    %c0_i32 = arith.constant 0 : i32
    %c0_i32_0 = arith.constant 0 : i32
    %c0_i32_1 = arith.constant 0 : i32
    return %c0_i32, %c0_i32_0 : i32, i32
  }
  func.func @transform_4(%arg0: i32, %arg1: i32) -> (i32, i32) {
    %c0_i32 = arith.constant 0 : i32
    %c0_i32_0 = arith.constant 0 : i32
    %c0_i32_1 = arith.constant 0 : i32
    return %c0_i32, %c0_i32_0 : i32, i32
  }
  func.func @transform_5(%arg0: i32, %arg1: i32) -> (i32, i32, i32) {
    %c0_i32 = arith.constant 0 : i32
    %c0_i32_0 = arith.constant 0 : i32
    return %arg0, %arg1, %c0_i32 : i32, i32, i32
  }
}

</mosaic_0001>

<llo_original>
// kernel: tpu_custom_call.1
$region0: #{tpu_custom_call.1}
  #allocation0 [shape = 'u32[]', space=smem, size = 0x4, offset = 0x4, fixed_abs, tag = 'smem constant byte address 0x4 - core index']
  #allocation1 [shape = 'u32[144,128]{1,0:T(1,128)}', space=vmem, size = 0x12000, scoped, tag = 'internal scratch']
  #allocation2 [shape = 'bf16[48,128]{1,0:T(16,128)(2,1)}', space=vmem, size = 0x3000, scoped, tag = 'scratch operand']
  #allocation3 [shape = 'bf16[48,128]{1,0:T(16,128)(2,1)}', space=vmem, size = 0x3000, scoped, tag = 'scratch operand']
  %s0 = inlined_call_operand.hbm [shape: bf16[2,48,48], index: 0, kind: input, shape index: {}]
  %s1 = inlined_call_operand.hbm [shape: f32[2,48,384], index: 1, kind: input, shape index: {}]
  %s2 = inlined_call_operand.hbm [shape: f32[128,384], index: 2, kind: input, shape index: {}]
  %s3 = inlined_call_operand.hbm [shape: f32[128,128], index: 3, kind: input, shape index: {}]
  %s4 = inlined_call_operand.hbm [shape: f32[1,128], index: 4, kind: input, shape index: {}]
  %s5 = inlined_call_operand.hbm [shape: f32[2,48,128], index: 5, kind: output, shape index: {}]
  %s6 = sld [smem:[#allocation0]]
  $region77: #{tpu_custom_call.1} parent=0
    _
  %s8 = ssub.s32 1, %s6
  %s9 = scalar_select 0, %s8, %s6
  $region1: #{tpu_custom_call.1} parent=0
    #allocation4 [shape = 'u8[8192]{0}', space=vmem, size = 0x2000, scoped, tag = 'input window, operand 0']
    #allocation5 [shape = 's32[2]{0}', space=sflag, size = 0x8, scoped, tag = 'scoped memory for tpu_custom_call.1']
    #allocation6 [shape = 's32[2]{0}', space=sflag, size = 0x8, scoped, tag = 'scoped memory for tpu_custom_call.1']
    #allocation7 [shape = 'u8[49152]{0}', space=vmem, size = 0xc000, scoped, tag = 'input window, operand 1']
    #allocation8 [shape = 's32[2]{0}', space=sflag, size = 0x8, scoped, tag = 'scoped memory for tpu_custom_call.1']
    #allocation9 [shape = 'u8[196608]{0}', space=vmem, size = 0x30000, scoped, tag = 'input window, operand 2, single buffered']
    #allocation10 [shape = 'u8[65536]{0}', space=vmem, size = 0x10000, scoped, tag = 'input window, operand 3, single buffered']
    #allocation11 [shape = 's32[1]{0}', space=sflag, size = 0x4, scoped, tag = 'scoped memory for tpu_custom_call.1']
    #allocation12 [shape = 'u8[512]{0}', space=vmem, size = 0x400, scoped, tag = 'input window, operand 4, single buffered']
    #allocation13 [shape = 'u8[16384]{0}', space=vmem, size = 0x4000, scoped, tag = 'output window, operand 0']
    %10 = vsyncpa [#allocation5], 0
    %s11 = scalar_lea.sflag [#allocation5], 1
    %12 = vsyncpa %s11, 0
    %13 = vsyncpa [#allocation8], 0
    %s14 = scalar_lea.sflag [#allocation8], 1
    %15 = vsyncpa %s14, 0
    %16 = vsyncpa [#allocation11], 0
    %17 = vsyncpa [#allocation6], 0
    %s18 = scalar_lea.sflag [#allocation6], 1
    %19 = vsyncpa %s18, 0
    loop: start=0, step=1, limit=8
    $region2: #{tpu_custom_call.1} parent=1 // loop_pre_header
      _
    $region3: #{tpu_custom_call.1} parent=1 // loop_header
      %s21 = sphi 0, %s25
      %p22 = scmp.ge.s32.totalorder %s21, 8
      %s28 = sphi 0, %s40
      %s29 = sphi 0, %s36
      %s30 = sphi 0, %s28
      %s31 = sphi 0, %s29
      %s32 = sphi 0, %s30
      %s33 = sphi 0, %s31
      %s45 = sphi 0, %s47
      %s48 = sphi 0, %s45
      %s49 = sphi 0, %s48
      %s65 = sphi 0, %s49
      %s73 = sphi 0, %s75
      %s76 = sphi 0, %s73
      %s77 = sphi 0, %s76
      %s93 = sphi 0, %s77
      %s97 = sphi 0, %s97
      %s99 = sphi 0, %s97
      %s100 = sphi 0, %s99
      %s114 = sphi 0, %s100
      %s118 = sphi 0, %s118
      %s120 = sphi 0, %s118
      %s121 = sphi 0, %s120
      %s135 = sphi 0, %s121
      %s139 = sphi 0, %s139
      %s141 = sphi 0, %s139
      %s142 = sphi 0, %s141
      %s156 = sphi 0, %s142
      %s164 = sphi 0, %s166
      %s167 = sphi 0, %s164
      %s168 = sphi 0, %s167
      %s184 = sphi 0, %s168
    $region4: #{tpu_custom_call.1} parent=1 // loop_header_branch
      %24 = sbr.rel (%p22) target = $region8
    $region5: #{tpu_custom_call.1} parent=1 // loop_body
      %s26 = ssub.s32 %s21, 1
      %s27 = ssub.s32 %s21, 2
      %s34 = sadd.s32 1, %s29
      %p35 = scmp.ge.s32.totalorder %s34, 3
      %s36 = scalar_select %p35, 0, %s34
      %s37 = sadd.s32 1, %s28
      %s38 = scalar_select %p35, %s37, %s28
      %p39 = scmp.ge.s32.totalorder %s38, 2
      %s40 = scalar_select %p39, 0, %s38
      %s41 = ssub.s32 %s28, %s40
      %s42 = ssub.s32 %s29, %s36
      %s43 = sor.u32 %s41, %s42
      %p44 = scmp.eq.s32.totalorder %s43, 0
      %s46 = sadd.s32 %s45, 1
      %s47 = scalar_select %p44, %s45, %s46
      %p50 = pneg %p44
      %p51 = scmp.eq.s32.totalorder %s21, 5
      %p52 = por %p50, %p51
      %p53 = scmp.ne.s32.totalorder %s45, %s48
      %p54 = scmp.eq.s32.totalorder %s21, 0
      %p55 = por %p53, %p54
      %p56 = scmp.ne.s32.totalorder %s45, %s48
      %p57 = scmp.eq.s32.totalorder %s26, 5
      %p58 = por %p56, %p57
      %p59 = scmp.ne.s32.totalorder %s48, %s49
      %p60 = scmp.eq.s32.totalorder %s26, 0
      %p61 = por %p59, %p60
      %p62 = scmp.ne.s32.totalorder %s48, %s49
      %p63 = scmp.eq.s32.totalorder %s27, 5
      %p64 = por %p62, %p63
      %p66 = scmp.ne.s32.totalorder %s49, %s65
      %p67 = scmp.eq.s32.totalorder %s27, 0
      %p68 = por %p66, %p67
      %s69 = ssub.s32 %s28, %s40
      %s70 = ssub.s32 %s29, %s36
      %s71 = sor.u32 %s69, %s70
      %p72 = scmp.eq.s32.totalorder %s71, 0
      %s74 = sadd.s32 %s73, 1
      %s75 = scalar_select %p72, %s73, %s74
      %p78 = pneg %p72
      %p79 = scmp.eq.s32.totalorder %s21, 5
      %p80 = por %p78, %p79
      %p81 = scmp.ne.s32.totalorder %s73, %s76
      %p82 = scmp.eq.s32.totalorder %s21, 0
      %p83 = por %p81, %p82
      %p84 = scmp.ne.s32.totalorder %s73, %s76
      %p85 = scmp.eq.s32.totalorder %s26, 5
      %p86 = por %p84, %p85
      %p87 = scmp.ne.s32.totalorder %s76, %s77
      %p88 = scmp.eq.s32.totalorder %s26, 0
      %p89 = por %p87, %p88
      %p90 = scmp.ne.s32.totalorder %s76, %s77
      %p91 = scmp.eq.s32.totalorder %s27, 5
      %p92 = por %p90, %p91
      %p94 = scmp.ne.s32.totalorder %s77, %s93
      %p95 = scmp.eq.s32.totalorder %s27, 0
      %p96 = por %p94, %p95
      %s98 = sadd.s32 %s97, 1
      %p101 = scmp.eq.s32.totalorder %s21, 5
      %p102 = scmp.ne.s32.totalorder %s97, %s99
      %p103 = scmp.eq.s32.totalorder %s21, 0
      %p104 = por %p102, %p103
      %p105 = scmp.ne.s32.totalorder %s97, %s99
      %p106 = scmp.eq.s32.totalorder %s26, 5
      %p107 = por %p105, %p106
      %p108 = scmp.ne.s32.totalorder %s99, %s100
      %p109 = scmp.eq.s32.totalorder %s26, 0
      %p110 = por %p108, %p109
      %p111 = scmp.ne.s32.totalorder %s99, %s100
      %p112 = scmp.eq.s32.totalorder %s27, 5
      %p113 = por %p111, %p112
      %p115 = scmp.ne.s32.totalorder %s100, %s114
      %p116 = scmp.eq.s32.totalorder %s27, 0
      %p117 = por %p115, %p116
      %s119 = sadd.s32 %s118, 1
      %p122 = scmp.eq.s32.totalorder %s21, 5
      %p123 = scmp.ne.s32.totalorder %s118, %s120
      %p124 = scmp.eq.s32.totalorder %s21, 0
      %p125 = por %p123, %p124
      %p126 = scmp.ne.s32.totalorder %s118, %s120
      %p127 = scmp.eq.s32.totalorder %s26, 5
      %p128 = por %p126, %p127
      %p129 = scmp.ne.s32.totalorder %s120, %s121
      %p130 = scmp.eq.s32.totalorder %s26, 0
      %p131 = por %p129, %p130
      %p132 = scmp.ne.s32.totalorder %s120, %s121
      %p133 = scmp.eq.s32.totalorder %s27, 5
      %p134 = por %p132, %p133
      %p136 = scmp.ne.s32.totalorder %s121, %s135
      %p137 = scmp.eq.s32.totalorder %s27, 0
      %p138 = por %p136, %p137
      %s140 = sadd.s32 %s139, 1
      %p143 = scmp.eq.s32.totalorder %s21, 5
      %p144 = scmp.ne.s32.totalorder %s139, %s141
      %p145 = scmp.eq.s32.totalorder %s21, 0
      %p146 = por %p144, %p145
      %p147 = scmp.ne.s32.totalorder %s139, %s141
      %p148 = scmp.eq.s32.totalorder %s26, 5
      %p149 = por %p147, %p148
      %p150 = scmp.ne.s32.totalorder %s141, %s142
      %p151 = scmp.eq.s32.totalorder %s26, 0
      %p152 = por %p150, %p151
      %p153 = scmp.ne.s32.totalorder %s141, %s142
      %p154 = scmp.eq.s32.totalorder %s27, 5
      %p155 = por %p153, %p154
      %p157 = scmp.ne.s32.totalorder %s142, %s156
      %p158 = scmp.eq.s32.totalorder %s27, 0
      %p159 = por %p157, %p158
      %s160 = ssub.s32 %s28, %s40
      %s161 = ssub.s32 %s29, %s36
      %s162 = sor.u32 %s160, %s161
      %p163 = scmp.eq.s32.totalorder %s162, 0
      %s165 = sadd.s32 %s164, 1
      %s166 = scalar_select %p163, %s164, %s165
      %p169 = pneg %p163
      %p170 = scmp.eq.s32.totalorder %s21, 5
      %p171 = por %p169, %p170
      %p172 = scmp.ne.s32.totalorder %s164, %s167
      %p173 = scmp.eq.s32.totalorder %s21, 0
      %p174 = por %p172, %p173
      %p175 = scmp.ne.s32.totalorder %s164, %s167
      %p176 = scmp.eq.s32.totalorder %s26, 5
      %p177 = por %p175, %p176
      %p178 = scmp.ne.s32.totalorder %s167, %s168
      %p179 = scmp.eq.s32.totalorder %s26, 0
      %p180 = por %p178, %p179
      %p181 = scmp.ne.s32.totalorder %s167, %s168
      %p182 = scmp.eq.s32.totalorder %s27, 5
      %p183 = por %p181, %p182
      %p185 = scmp.ne.s32.totalorder %s168, %s184
      %p186 = scmp.eq.s32.totalorder %s27, 0
      %p187 = por %p185, %p186
      %p188 = scmp.le.s32.totalorder 1, %s21
      %p189 = scmp.lt.s32.totalorder %s21, 7
      %p190 = pnand %p188, %p189
      %p191 = pneg %p190
      // Predicated region
      $region9: #{tpu_custom_call.1} parent=5 // pred_check
        _
      $region10: #{tpu_custom_call.1} parent=5 // pred_check_branch
        %193 = sbr.rel (%p190) target = $region12
      $region11: #{tpu_custom_call.1} parent=5 // pred_region
        %s194 = ssub.s32 %s21, 1
        // Predicated region
        $region13: #{tpu_custom_call.1} parent=11 // pred_check
          %p195 = pneg %p110
        $region14: #{tpu_custom_call.1} parent=11 // pred_check_branch
          %197 = sbr.rel (%p195) target = $region16
        $region15: #{tpu_custom_call.1} parent=11 // pred_region
          %s199 = ssub.s32 6144, 6144
          %200 = vsyncadd [#allocation8], %s199
          %s201 = sshll.u32 [#allocation9], 4
          %s202 = int_to_ptr.vmem [resolvable:$true] %s201
          %207 = dma.hbm_to_vmem [thread:$0]  %s2, 6144, %s202, [#allocation8], 384, 384, 24
        $region16: #{tpu_custom_call.1} parent=11 // pred_fallthru
          _
        // Predicated region
        $region17: #{tpu_custom_call.1} parent=11 // pred_check
          %p208 = pneg %p131
        $region18: #{tpu_custom_call.1} parent=11 // pred_check_branch
          %210 = sbr.rel (%p208) target = $region20
        $region19: #{tpu_custom_call.1} parent=11 // pred_region
          %s212 = ssub.s32 2048, 2048
          %213 = vsyncadd [#allocation11], %s212
          %s214 = sshll.u32 [#allocation10], 4
          %s215 = int_to_ptr.vmem [resolvable:$true] %s214
          %220 = dma.hbm_to_vmem [thread:$0]  %s3, 2048, %s215, [#allocation11], 128, 128, 8
        $region20: #{tpu_custom_call.1} parent=11 // pred_fallthru
          _
        // Predicated region
        $region21: #{tpu_custom_call.1} parent=11 // pred_check
          %p221 = pneg %p152
        $region22: #{tpu_custom_call.1} parent=11 // pred_check_branch
          %223 = sbr.rel (%p221) target = $region24
        $region23: #{tpu_custom_call.1} parent=11 // pred_region
          %s225 = ssub.s32 16, 16
          %226 = vsyncadd [#allocation11], %s225
          %s228 = sshll.u32 [#allocation12], 4
          %s229 = int_to_ptr.vmem [resolvable:$true] %s228
          %231 = dma.hbm_to_vmem [thread:$0]  %s4, 16, %s229, [#allocation11]
        $region24: #{tpu_custom_call.1} parent=11 // pred_fallthru
          _
      $region12: #{tpu_custom_call.1} parent=5 // pred_fallthru
        _
      %p232 = scmp.lt.s32.totalorder %s21, 6
      // Predicated region
      $region25: #{tpu_custom_call.1} parent=5 // pred_check
        %p233 = pneg %p232
      $region26: #{tpu_custom_call.1} parent=5 // pred_check_branch
        %235 = sbr.rel (%p233) target = $region28
      $region27: #{tpu_custom_call.1} parent=5 // pred_region
        // Predicated region
        $region29: #{tpu_custom_call.1} parent=27 // pred_check
          %p236 = pneg %p55
        $region30: #{tpu_custom_call.1} parent=27 // pred_check_branch
          %238 = sbr.rel (%p236) target = $region32
        $region31: #{tpu_custom_call.1} parent=27 // pred_region
          %s239 = sand.u32 %s45, 1
          %s240 = scalar_lea.sflag [#allocation5], %s239
          %s241 = sand.u32 %s45, 1
          %s242 = smul.addr %s241, 8
          %s243 = scalar_lea.vmem [#allocation4], %s242
          %s244 = smul.u32 2, %s29
          %s246 = ssub.s32 128, 128
          %247 = vsyncadd %s240, %s246
          %s248 = smul.addr %s28, 6
          %s249 = sadd.s32 %s244, %s248
          %s250 = smul.addr %s249, 64
          %s251 = scalar_lea.hbm %s0, %s250
          %s252 = sshll.u32 %s243, 4
          %s253 = int_to_ptr.vmem [resolvable:$true] %s252
          %258 = dma.hbm_to_vmem [thread:$0]  %s251, 128, %s253, %s240, 64, 64, 4
        $region32: #{tpu_custom_call.1} parent=27 // pred_fallthru
          _
        // Predicated region
        $region33: #{tpu_custom_call.1} parent=27 // pred_check
          %p259 = pneg %p83
        $region34: #{tpu_custom_call.1} parent=27 // pred_check_branch
          %261 = sbr.rel (%p259) target = $region36
        $region35: #{tpu_custom_call.1} parent=27 // pred_region
          %s262 = sand.u32 %s21, 1
          %s263 = scalar_lea.sflag [#allocation8], %s262
          %s264 = sand.u32 %s73, 1
          %s265 = smul.addr %s264, 48
          %s266 = scalar_lea.vmem [#allocation7], %s265
          %s267 = smul.u32 2, %s29
          %s269 = ssub.s32 768, 768
          %270 = vsyncadd %s263, %s269
          %s271 = smul.addr %s267, 3
          %s272 = smul.addr %s28, 18
          %s273 = sadd.s32 %s271, %s272
          %s274 = smul.addr %s273, 128
          %s275 = scalar_lea.hbm %s1, %s274
          %s276 = sshll.u32 %s266, 4
          %s277 = int_to_ptr.vmem [resolvable:$true] %s276
          %282 = dma.hbm_to_vmem [thread:$0]  %s275, 768, %s277, %s263, 384, 384, 24
        $region36: #{tpu_custom_call.1} parent=27 // pred_fallthru
          _
      $region28: #{tpu_custom_call.1} parent=5 // pred_fallthru
        _
      %p283 = scmp.le.s32.totalorder 1, %s21
      %p284 = scmp.lt.s32.totalorder %s21, 7
      %p285 = pnand %p283, %p284
      %p286 = pneg %p285
      // Predicated region
      $region37: #{tpu_custom_call.1} parent=5 // pred_check
        _
      $region38: #{tpu_custom_call.1} parent=5 // pred_check_branch
        %288 = sbr.rel (%p285) target = $region40
      $region39: #{tpu_custom_call.1} parent=5 // pred_region
        %s289 = ssub.s32 %s21, 1
        %s290 = sand.u32 %s48, 1
        %s291 = scalar_lea.sflag [#allocation5], %s290
        %s292 = sand.u32 %s48, 1
        %s293 = smul.addr %s292, 8
        %s294 = scalar_lea.vmem [#allocation4], %s293
        // Predicated region
        $region41: #{tpu_custom_call.1} parent=39 // pred_check
          %p295 = pneg %p61
        $region42: #{tpu_custom_call.1} parent=39 // pred_check_branch
          %297 = sbr.rel (%p295) target = $region44
        $region43: #{tpu_custom_call.1} parent=39 // pred_region
          %298 = dma.done %s291, 128
        $region44: #{tpu_custom_call.1} parent=39 // pred_fallthru
          _
        %s299 = sand.u32 %s26, 1
        %s300 = scalar_lea.sflag [#allocation8], %s299
        %s301 = sand.u32 %s76, 1
        %s302 = smul.addr %s301, 48
        %s303 = scalar_lea.vmem [#allocation7], %s302
        // Predicated region
        $region45: #{tpu_custom_call.1} parent=39 // pred_check
          %p304 = pneg %p89
        $region46: #{tpu_custom_call.1} parent=39 // pred_check_branch
          %306 = sbr.rel (%p304) target = $region48
        $region47: #{tpu_custom_call.1} parent=39 // pred_region
          %307 = dma.done %s300, 768
        $region48: #{tpu_custom_call.1} parent=39 // pred_fallthru
          _
        // Predicated region
        $region49: #{tpu_custom_call.1} parent=39 // pred_check
          %p308 = pneg %p110
        $region50: #{tpu_custom_call.1} parent=39 // pred_check_branch
          %310 = sbr.rel (%p308) target = $region52
        $region51: #{tpu_custom_call.1} parent=39 // pred_region
          %311 = dma.done [#allocation8], 6144
        $region52: #{tpu_custom_call.1} parent=39 // pred_fallthru
          _
        // Predicated region
        $region53: #{tpu_custom_call.1} parent=39 // pred_check
          %p312 = pneg %p131
        $region54: #{tpu_custom_call.1} parent=39 // pred_check_branch
          %314 = sbr.rel (%p312) target = $region56
        $region55: #{tpu_custom_call.1} parent=39 // pred_region
          %315 = dma.done [#allocation11], 2048
        $region56: #{tpu_custom_call.1} parent=39 // pred_fallthru
          _
        // Predicated region
        $region57: #{tpu_custom_call.1} parent=39 // pred_check
          %p316 = pneg %p152
        $region58: #{tpu_custom_call.1} parent=39 // pred_check_branch
          %318 = sbr.rel (%p316) target = $region60
        $region59: #{tpu_custom_call.1} parent=39 // pred_region
          %319 = dma.done [#allocation11], 16
        $region60: #{tpu_custom_call.1} parent=39 // pred_fallthru
          _
        %s320 = sand.u32 %s48, 1
        %s321 = scalar_lea.sflag [#allocation5], %s320
        %s322 = sand.u32 %s48, 1
        %s323 = smul.addr %s322, 8
        %s324 = scalar_lea.vmem [#allocation4], %s323
        %p325 = pneg %p61
        %p326 = pneg %p58
        %s327 = sand.u32 %s26, 1
        %s328 = scalar_lea.sflag [#allocation8], %s327
        %s329 = sand.u32 %s76, 1
        %s330 = smul.addr %s329, 48
        %s331 = scalar_lea.vmem [#allocation7], %s330
        %p332 = pneg %p89
        %p333 = pneg %p86
        %p334 = pneg %p110
        %p335 = pneg %p107
        %p336 = pneg %p131
        %p337 = pneg %p128
        %p338 = pneg %p152
        %p339 = pneg %p149
        %p340 = pneg %p180
        %p341 = pneg %p177
        %s342 = sand.u32 %s167, 1
        %s343 = scalar_lea.sflag [#allocation6], %s342
        %s344 = sand.u32 %s167, 1
        %s345 = smul.addr %s344, 16
        %s346 = scalar_lea.vmem [#allocation13], %s345
        %s347 = smul.u32 2, %s31
        %s348 = smul.u32 2, %s31
        %s349 = smul.u32 2, %s31
        %p351 = scmp.eq.s32.totalorder %s31, 0
        // Predicated region
        $region61: #{tpu_custom_call.1} parent=39 // pred_check
          %p352 = pneg %p351
        $region62: #{tpu_custom_call.1} parent=39 // pred_check_branch
          %354 = sbr.rel (%p352) target = $region64
        $region63: #{tpu_custom_call.1} parent=39 // pred_region
          %355 = vst [vmem:[#allocation2] sm:$0xff] 0
          %356 = vst [vmem:[#allocation2 + $0x8] sm:$0xff] 0
          %357 = vst [vmem:[#allocation2 + $0x10] sm:$0xff] 0
          %358 = vst [vmem:[#allocation3] sm:$0xff] 0
          %359 = vst [vmem:[#allocation3 + $0x8] sm:$0xff] 0
          %360 = vst [vmem:[#allocation3 + $0x10] sm:$0xff] 0
        $region64: #{tpu_custom_call.1} parent=39 // pred_fallthru
          _
        %v361 = vld [vmem:[%s294] sm:$0xf]
        %v362 = vld [vmem:[%s294 + $0x4] sm:$0xf]
        %v363 = vld [vmem:[#allocation2] sm:$0xff]
        %v364 = vld [vmem:[#allocation2 + $0x8] sm:$0xff]
        %v365 = vld [vmem:[#allocation2 + $0x10] sm:$0xff]
        %v368 = vunpack.c.l.b16 %v361
        %v369 = vunpack.c.l.b16 %v362
        %v370 = vpack.c.b16 %v369, %v368
        %vm371 = vcmask 392192
        %v373 = vsel %vm371, %v370, 0
        %375 = vmatprep.subr.bf16.mxu0 0
        %376 = vmatpush1.bf16.msra.mxu0 %v363
        %377 = vmatprep.subr.bf16.mxu0 0
        %378 = vmatpush1.bf16.msra.mxu0 %v364
        %379 = vmatprep.subr.bf16.mxu0 0
        %380 = vmatpush1.bf16.msra.mxu0 %v365
        %381 = vmatprep.subr.bf16.mxu0 0
        %382 = vmatpush1.bf16.msra.mxu0 0
        %383 = vmatprep.subr.bf16.mxu0 0
        %384 = vmatpush1.bf16.msra.mxu0 0
        %385 = vmatprep.subr.bf16.mxu0 0
        %386 = vmatpush1.bf16.msra.mxu0 0
        %387 = vmatprep.subr.bf16.mxu0 0
        %388 = vmatpush1.bf16.msra.mxu0 0
        %389 = vmatprep.subr.bf16.mxu0 0
        %390 = vmatpush1.bf16.msra.mxu0 0
        %391 = vmatprep.subr.bf16.mxu0 0
        %392 = vmatpush1.bf16.msra.mxu0 0
        %393 = vmatprep.subr.bf16.mxu0 0
        %394 = vmatpush1.bf16.msra.mxu0 0
        %395 = vmatprep.subr.bf16.mxu0 0
        %396 = vmatpush1.bf16.msra.mxu0 0
        %397 = vmatprep.subr.bf16.mxu0 0
        %398 = vmatpush1.bf16.msra.mxu0 0
        %399 = vmatprep.subr.bf16.mxu0 0
        %400 = vmatpush1.bf16.msra.mxu0 0
        %401 = vmatprep.subr.bf16.mxu0 0
        %402 = vmatpush1.bf16.msra.mxu0 0
        %403 = vmatprep.subr.bf16.mxu0 0
        %404 = vmatpush1.bf16.msra.mxu0 0
        %405 = vmatprep.subr.bf16.mxu0 0
        %406 = vmatpush1.bf16.msra.mxu0 0
        %407 = vmatprep.mubr.bf16.mxu0 0
        %408 = vmatmul.mubr.bf16.gmra.mrb[0].mxu0 %v373
        %v409 = vpop.f32.mrb[0].mxu0
        %v410 = vadd.f32 0.0, %v409
        %v411 = vpop.f32.mrb[0].mxu0
        %v412 = vpop.f32.mrb[0].mxu0
        %v413 = vadd.f32 0.0, %v412
        %v414 = vpop.f32.mrb[0].mxu0
        %415 = vdwg.mxu0
        %v416 = vld [vmem:[#allocation3] sm:$0xff]
        %v417 = vld [vmem:[#allocation3 + $0x8] sm:$0xff]
        %v418 = vld [vmem:[#allocation3 + $0x10] sm:$0xff]
        %419 = vmatprep.subr.bf16.mxu0 0
        %420 = vmatpush1.bf16.msra.mxu0 %v416
        %421 = vmatprep.subr.bf16.mxu0 0
        %422 = vmatpush1.bf16.msra.mxu0 %v417
        %423 = vmatprep.subr.bf16.mxu0 0
        %424 = vmatpush1.bf16.msra.mxu0 %v418
        %425 = vmatprep.subr.bf16.mxu0 0
        %426 = vmatpush1.bf16.msra.mxu0 0
        %427 = vmatprep.subr.bf16.mxu0 0
        %428 = vmatpush1.bf16.msra.mxu0 0
        %429 = vmatprep.subr.bf16.mxu0 0
        %430 = vmatpush1.bf16.msra.mxu0 0
        %431 = vmatprep.subr.bf16.mxu0 0
        %432 = vmatpush1.bf16.msra.mxu0 0
        %433 = vmatprep.subr.bf16.mxu0 0
        %434 = vmatpush1.bf16.msra.mxu0 0
        %435 = vmatprep.subr.bf16.mxu0 0
        %436 = vmatpush1.bf16.msra.mxu0 0
        %437 = vmatprep.subr.bf16.mxu0 0
        %438 = vmatpush1.bf16.msra.mxu0 0
        %439 = vmatprep.subr.bf16.mxu0 0
        %440 = vmatpush1.bf16.msra.mxu0 0
        %441 = vmatprep.subr.bf16.mxu0 0
        %442 = vmatpush1.bf16.msra.mxu0 0
        %443 = vmatprep.subr.bf16.mxu0 0
        %444 = vmatpush1.bf16.msra.mxu0 0
        %445 = vmatprep.subr.bf16.mxu0 0
        %446 = vmatpush1.bf16.msra.mxu0 0
        %447 = vmatprep.subr.bf16.mxu0 0
        %448 = vmatpush1.bf16.msra.mxu0 0
        %449 = vmatprep.subr.bf16.mxu0 0
        %450 = vmatpush1.bf16.msra.mxu0 0
        %451 = vmatprep.mubr.bf16.mxu0 0
        %452 = vmatmul.mubr.bf16.gmra.mrb[0].mxu0 %v373
        %v453 = vpop.f32.mrb[0].mxu0
        %v454 = vadd.f32 0.0, %v453
        %v455 = vpop.f32.mrb[0].mxu0
        %v456 = vpop.f32.mrb[0].mxu0
        %v457 = vadd.f32 0.0, %v456
        %v458 = vpop.f32.mrb[0].mxu0
        %459 = vdwg.mxu0
        %v460 = vld [vmem:[%s303] sm:$0xff]
        %v461 = vld [vmem:[%s303 + $0x8] sm:$0xff]
        %v462 = vld [vmem:[%s303 + $0x10] sm:$0xff]
        %v463 = vld [vmem:[%s303 + $0x18] sm:$0xff]
        %v464 = vld [vmem:[%s303 + $0x20] sm:$0xff]
        %v465 = vld [vmem:[%s303 + $0x28] sm:$0xff]
        %v466 = vld [vmem:[#allocation9] sm:$0xff]
        %v467 = vld [vmem:[#allocation9 + $0x8] sm:$0xff]
        %v468 = vld [vmem:[#allocation9 + $0x10] sm:$0xff]
        %v469 = vld [vmem:[#allocation9 + $0x18] sm:$0xff]
        %v470 = vld [vmem:[#allocation9 + $0x20] sm:$0xff]
        %v471 = vld [vmem:[#allocation9 + $0x28] sm:$0xff]
        %v472 = vld [vmem:[#allocation9 + $0x30] sm:$0xff]
        %v473 = vld [vmem:[#allocation9 + $0x38] sm:$0xff]
        %v474 = vld [vmem:[#allocation9 + $0x40] sm:$0xff]
        %v475 = vld [vmem:[#allocation9 + $0x48] sm:$0xff]
        %v476 = vld [vmem:[#allocation9 + $0x50] sm:$0xff]
        %v477 = vld [vmem:[#allocation9 + $0x58] sm:$0xff]
        %v478 = vld [vmem:[#allocation9 + $0x60] sm:$0xff]
        %v479 = vld [vmem:[#allocation9 + $0x68] sm:$0xff]
        %v480 = vld [vmem:[#allocation9 + $0x70] sm:$0xff]
        %v481 = vld [vmem:[#allocation9 + $0x78] sm:$0xff]
        %v482 = vld [vmem:[#allocation9 + $0x80] sm:$0xff]
        %v483 = vld [vmem:[#allocation9 + $0x88] sm:$0xff]
        %v484 = vld [vmem:[#allocation9 + $0x90] sm:$0xff]
        %v485 = vld [vmem:[#allocation9 + $0x98] sm:$0xff]
        %v486 = vld [vmem:[#allocation9 + $0xa0] sm:$0xff]
        %v487 = vld [vmem:[#allocation9 + $0xa8] sm:$0xff]
        %v488 = vld [vmem:[#allocation9 + $0xb0] sm:$0xff]
        %v489 = vld [vmem:[#allocation9 + $0xb8] sm:$0xff]
        %v490 = vld [vmem:[#allocation9 + $0xc0] sm:$0xff]
        %v491 = vld [vmem:[#allocation9 + $0xc8] sm:$0xff]
        %v492 = vld [vmem:[#allocation9 + $0xd0] sm:$0xff]
        %v493 = vld [vmem:[#allocation9 + $0xd8] sm:$0xff]
        %v494 = vld [vmem:[#allocation9 + $0xe0] sm:$0xff]
        %v495 = vld [vmem:[#allocation9 + $0xe8] sm:$0xff]
        %v496 = vld [vmem:[#allocation9 + $0xf0] sm:$0xff]
        %v497 = vld [vmem:[#allocation9 + $0xf8] sm:$0xff]
        %v498 = vld [vmem:[#allocation9 + $0x100] sm:$0xff]
        %v499 = vld [vmem:[#allocation9 + $0x108] sm:$0xff]
        %v500 = vld [vmem:[#allocation9 + $0x110] sm:$0xff]
        %v501 = vld [vmem:[#allocation9 + $0x118] sm:$0xff]
        %v502 = vld [vmem:[#allocation9 + $0x120] sm:$0xff]
        %v503 = vld [vmem:[#allocation9 + $0x128] sm:$0xff]
        %v504 = vld [vmem:[#allocation9 + $0x130] sm:$0xff]
        %v505 = vld [vmem:[#allocation9 + $0x138] sm:$0xff]
        %v506 = vld [vmem:[#allocation9 + $0x140] sm:$0xff]
        %v507 = vld [vmem:[#allocation9 + $0x148] sm:$0xff]
        %v508 = vld [vmem:[#allocation9 + $0x150] sm:$0xff]
        %v509 = vld [vmem:[#allocation9 + $0x158] sm:$0xff]
        %v510 = vld [vmem:[#allocation9 + $0x160] sm:$0xff]
        %v511 = vld [vmem:[#allocation9 + $0x168] sm:$0xff]
        %v512 = vld [vmem:[#allocation9 + $0x170] sm:$0xff]
        %v513 = vld [vmem:[#allocation9 + $0x178] sm:$0xff]
        %514 = vmatprep.subr.mxu0 %v467
        %515 = vmatpush1.msra.mxu0 %v466
        %516 = vmatprep.subr.mxu0 %v470
        %517 = vmatpush1.msra.mxu0 %v469
        %518 = vmatprep.subr.mxu0 %v473
        %519 = vmatpush1.msra.mxu0 %v472
        %520 = vmatprep.subr.mxu0 %v476
        %521 = vmatpush1.msra.mxu0 %v475
        %522 = vmatprep.subr.mxu0 %v479
        %523 = vmatpush1.msra.mxu0 %v478
        %524 = vmatprep.subr.mxu0 %v482
        %525 = vmatpush1.msra.mxu0 %v481
        %526 = vmatprep.subr.mxu0 %v485
        %527 = vmatpush1.msra.mxu0 %v484
        %528 = vmatprep.subr.mxu0 %v488
        %529 = vmatpush1.msra.mxu0 %v487
        %530 = vmatprep.subr.mxu0 %v491
        %531 = vmatpush1.msra.mxu0 %v490
        %532 = vmatprep.subr.mxu0 %v494
        %533 = vmatpush1.msra.mxu0 %v493
        %534 = vmatprep.subr.mxu0 %v497
        %535 = vmatpush1.msra.mxu0 %v496
        %536 = vmatprep.subr.mxu0 %v500
        %537 = vmatpush1.msra.mxu0 %v499
        %538 = vmatprep.subr.mxu0 %v503
        %539 = vmatpush1.msra.mxu0 %v502
        %540 = vmatprep.subr.mxu0 %v506
        %541 = vmatpush1.msra.mxu0 %v505
        %542 = vmatprep.subr.mxu0 %v509
        %543 = vmatpush1.msra.mxu0 %v508
        %544 = vmatprep.subr.mxu0 %v512
        %545 = vmatpush1.msra.mxu0 %v511
        %546 = vmatprep.subr.mxu0 0.0
        %547 = vmatpush1.msra.mxu0 0.0
        %548 = vmatprep.subr.mxu0 0.0
        %549 = vmatpush1.msra.mxu0 0.0
        %550 = vmatprep.subr.mxu0 0.0
        %551 = vmatpush1.msra.mxu0 0.0
        %552 = vmatprep.subr.mxu0 0.0
        %553 = vmatpush1.msra.mxu0 0.0
        %554 = vmatprep.subr.mxu0 0.0
        %555 = vmatpush1.msra.mxu0 0.0
        %556 = vmatprep.subr.mxu0 0.0
        %557 = vmatpush1.msra.mxu0 0.0
        %558 = vmatprep.subr.mxu0 0.0
        %559 = vmatpush1.msra.mxu0 0.0
        %560 = vmatprep.subr.mxu0 0.0
        %561 = vmatpush1.msra.mxu0 0.0
        %562 = vmatprep.subr.mxu0 0.0
        %563 = vmatpush1.msra.mxu0 0.0
        %564 = vmatprep.subr.mxu0 0.0
        %565 = vmatpush1.msra.mxu0 0.0
        %566 = vmatprep.subr.mxu0 0.0
        %567 = vmatpush1.msra.mxu0 0.0
        %568 = vmatprep.subr.mxu0 0.0
        %569 = vmatpush1.msra.mxu0 0.0
        %570 = vmatprep.subr.mxu0 0.0
        %571 = vmatpush1.msra.mxu0 0.0
        %572 = vmatprep.subr.mxu0 0.0
        %573 = vmatpush1.msra.mxu0 0.0
        %574 = vmatprep.subr.mxu0 0.0
        %575 = vmatpush1.msra.mxu0 0.0
        %576 = vmatprep.subr.mxu0 0.0
        %577 = vmatpush1.msra.mxu0 0.0
        %578 = vmatprep.mubr.f32.mxu0 0.0
        %579 = vmatmul.mubr.f32.gmra.mrb[0].mxu0 %v410
        %v580 = vpop.f32.mrb[0].mxu0
        %v581 = vadd.f32 0.0, %v580
        %v582 = vpop.f32.mrb[0].mxu0
        %v583 = vadd.f32 0.0, %v582
        %584 = vmatprep.mubr.f32.mxu0 0.0
        %585 = vmatmul.mubr.f32.gmra.mrb[0].mxu0 %v413
        %v586 = vpop.f32.mrb[0].mxu0
        %v587 = vadd.f32 0.0, %v586
        %v588 = vpop.f32.mrb[0].mxu0
        %v589 = vadd.f32 0.0, %v588
        %590 = vdwg.mxu0
        %591 = vmatprep.subr.mxu0 0.0
        %592 = vmatpush1.msra.mxu0 %v468
        %593 = vmatprep.subr.mxu0 0.0
        %594 = vmatpush1.msra.mxu0 %v471
        %595 = vmatprep.subr.mxu0 0.0
        %596 = vmatpush1.msra.mxu0 %v474
        %597 = vmatprep.subr.mxu0 0.0
        %598 = vmatpush1.msra.mxu0 %v477
        %599 = vmatprep.subr.mxu0 0.0
        %600 = vmatpush1.msra.mxu0 %v480
        %601 = vmatprep.subr.mxu0 0.0
        %602 = vmatpush1.msra.mxu0 %v483
        %603 = vmatprep.subr.mxu0 0.0
        %604 = vmatpush1.msra.mxu0 %v486
        %605 = vmatprep.subr.mxu0 0.0
        %606 = vmatpush1.msra.mxu0 %v489
        %607 = vmatprep.subr.mxu0 0.0
        %608 = vmatpush1.msra.mxu0 %v492
        %609 = vmatprep.subr.mxu0 0.0
        %610 = vmatpush1.msra.mxu0 %v495
        %611 = vmatprep.subr.mxu0 0.0
        %612 = vmatpush1.msra.mxu0 %v498
        %613 = vmatprep.subr.mxu0 0.0
        %614 = vmatpush1.msra.mxu0 %v501
        %615 = vmatprep.subr.mxu0 0.0
        %616 = vmatpush1.msra.mxu0 %v504
        %617 = vmatprep.subr.mxu0 0.0
        %618 = vmatpush1.msra.mxu0 %v507
        %619 = vmatprep.subr.mxu0 0.0
        %620 = vmatpush1.msra.mxu0 %v510
        %621 = vmatprep.subr.mxu0 0.0
        %622 = vmatpush1.msra.mxu0 %v513
        %623 = vmatprep.subr.mxu0 0.0
        %624 = vmatpush1.msra.mxu0 0.0
        %625 = vmatprep.subr.mxu0 0.0
        %626 = vmatpush1.msra.mxu0 0.0
        %627 = vmatprep.subr.mxu0 0.0
        %628 = vmatpush1.msra.mxu0 0.0
        %629 = vmatprep.subr.mxu0 0.0
        %630 = vmatpush1.msra.mxu0 0.0
        %631 = vmatprep.subr.mxu0 0.0
        %632 = vmatpush1.msra.mxu0 0.0
        %633 = vmatprep.subr.mxu0 0.0
        %634 = vmatpush1.msra.mxu0 0.0
        %635 = vmatprep.subr.mxu0 0.0
        %636 = vmatpush1.msra.mxu0 0.0
        %637 = vmatprep.subr.mxu0 0.0
        %638 = vmatpush1.msra.mxu0 0.0
        %639 = vmatprep.subr.mxu0 0.0
        %640 = vmatpush1.msra.mxu0 0.0
        %641 = vmatprep.subr.mxu0 0.0
        %642 = vmatpush1.msra.mxu0 0.0
        %643 = vmatprep.subr.mxu0 0.0
        %644 = vmatpush1.msra.mxu0 0.0
        %645 = vmatprep.subr.mxu0 0.0
        %646 = vmatpush1.msra.mxu0 0.0
        %647 = vmatprep.subr.mxu0 0.0
        %648 = vmatpush1.msra.mxu0 0.0
        %649 = vmatprep.subr.mxu0 0.0
        %650 = vmatpush1.msra.mxu0 0.0
        %651 = vmatprep.subr.mxu0 0.0
        %652 = vmatpush1.msra.mxu0 0.0
        %653 = vmatprep.subr.mxu0 0.0
        %654 = vmatpush1.msra.mxu0 0.0
        %655 = vmatprep.mubr.f32.mxu0 0.0
        %656 = vmatmul.mubr.f32.gmra.mrb[0].mxu0 %v410
        %v657 = vpop.f32.mrb[0].mxu0
        %v658 = vadd.f32 0.0, %v657
        %v659 = vpop.f32.mrb[0].mxu0
        %660 = vmatprep.mubr.f32.mxu0 0.0
        %661 = vmatmul.mubr.f32.gmra.mrb[0].mxu0 %v413
        %v662 = vpop.f32.mrb[0].mxu0
        %v663 = vadd.f32 0.0, %v662
        %v664 = vpop.f32.mrb[0].mxu0
        %665 = vdwg.mxu0
        %v666 = vadd.f32 %v460, %v581
        %v667 = vadd.f32 %v461, %v583
        %v668 = vadd.f32 %v462, %v658
        %v669 = vadd.f32 %v463, %v587
        %v670 = vadd.f32 %v464, %v589
        %v671 = vadd.f32 %v465, %v663
        %v672 = vxor.u32 %v666, 2147483648
        %v673 = vxor.u32 %v669, 2147483648
        %v674 = vmul.f32 %v672, 1.442695
        %v675 = vpow.pop %v674
        %v676 = vmul.f32 %v673, 1.442695
        %v677 = vpow.pop %v676
        %v678 = vadd.f32 %v675, 1.0
        %v679 = vadd.f32 %v677, 1.0
        %v680 = vrcp.pop %v678
        %v681 = vmul.f32 1.0, %v680
        %v682 = vrcp.pop %v679
        %v683 = vmul.f32 1.0, %v682
        %v684 = vxor.u32 %v667, 2147483648
        %v685 = vxor.u32 %v670, 2147483648
        %v686 = vmul.f32 %v684, 1.442695
        %v687 = vpow.pop %v686
        %v688 = vmul.f32 %v685, 1.442695
        %v689 = vpow.pop %v688
        %v690 = vadd.f32 %v687, 1.0
        %v691 = vadd.f32 %v689, 1.0
        %v692 = vrcp.pop %v690
        %v693 = vmul.f32 1.0, %v692
        %v694 = vrcp.pop %v691
        %v695 = vmul.f32 1.0, %v694
        %v696 = vtanh.pop %v668
        %v697 = vtanh.pop %v671
        %v698 = vmul.f32 %v681, %v696
        %v699 = vmul.f32 %v683, %v697
        %v700 = vadd.f32 %v698, %v454
        %v701 = vadd.f32 %v699, %v457
        %v702 = vtanh.pop %v700
        %v703 = vtanh.pop %v701
        %v704 = vmul.f32 %v693, %v702
        %v705 = vmul.f32 %v695, %v703
        %v706 = vld [vmem:[#allocation10] sm:$0xff]
        %v707 = vld [vmem:[#allocation10 + $0x8] sm:$0xff]
        %v708 = vld [vmem:[#allocation10 + $0x10] sm:$0xff]
        %v709 = vld [vmem:[#allocation10 + $0x18] sm:$0xff]
        %v710 = vld [vmem:[#allocation10 + $0x20] sm:$0xff]
        %v711 = vld [vmem:[#allocation10 + $0x28] sm:$0xff]
        %v712 = vld [vmem:[#allocation10 + $0x30] sm:$0xff]
        %v713 = vld [vmem:[#allocation10 + $0x38] sm:$0xff]
        %v714 = vld [vmem:[#allocation10 + $0x40] sm:$0xff]
        %v715 = vld [vmem:[#allocation10 + $0x48] sm:$0xff]
        %v716 = vld [vmem:[#allocation10 + $0x50] sm:$0xff]
        %v717 = vld [vmem:[#allocation10 + $0x58] sm:$0xff]
        %v718 = vld [vmem:[#allocation10 + $0x60] sm:$0xff]
        %v719 = vld [vmem:[#allocation10 + $0x68] sm:$0xff]
        %v720 = vld [vmem:[#allocation10 + $0x70] sm:$0xff]
        %v721 = vld [vmem:[#allocation10 + $0x78] sm:$0xff]
        %v722 = vld [vmem:[#allocation12] sm:$0x1]
        %v724 = vlaneseq
        %v725 = vshrl.u32 %v724, 7
        %v726 = vsub.s32 0, %v725
        %v727 = vrot.slane %v722, %v726
        %729 = vmatprep.subr.mxu0 0.0
        %730 = vmatpush1.msra.mxu0 %v706
        %731 = vmatprep.subr.mxu0 0.0
        %732 = vmatpush1.msra.mxu0 %v707
        %733 = vmatprep.subr.mxu0 0.0
        %734 = vmatpush1.msra.mxu0 %v708
        %735 = vmatprep.subr.mxu0 0.0
        %736 = vmatpush1.msra.mxu0 %v709
        %737 = vmatprep.subr.mxu0 0.0
        %738 = vmatpush1.msra.mxu0 %v710
        %739 = vmatprep.subr.mxu0 0.0
        %740 = vmatpush1.msra.mxu0 %v711
        %741 = vmatprep.subr.mxu0 0.0
        %742 = vmatpush1.msra.mxu0 %v712
        %743 = vmatprep.subr.mxu0 0.0
        %744 = vmatpush1.msra.mxu0 %v713
        %745 = vmatprep.subr.mxu0 0.0
        %746 = vmatpush1.msra.mxu0 %v714
        %747 = vmatprep.subr.mxu0 0.0
        %748 = vmatpush1.msra.mxu0 %v715
        %749 = vmatprep.subr.mxu0 0.0
        %750 = vmatpush1.msra.mxu0 %v716
        %751 = vmatprep.subr.mxu0 0.0
        %752 = vmatpush1.msra.mxu0 %v717
        %753 = vmatprep.subr.mxu0 0.0
        %754 = vmatpush1.msra.mxu0 %v718
        %755 = vmatprep.subr.mxu0 0.0
        %756 = vmatpush1.msra.mxu0 %v719
        %757 = vmatprep.subr.mxu0 0.0
        %758 = vmatpush1.msra.mxu0 %v720
        %759 = vmatprep.subr.mxu0 0.0
        %760 = vmatpush1.msra.mxu0 %v721
        %761 = vmatprep.subr.mxu0 0.0
        %762 = vmatpush1.msra.mxu0 0.0
        %763 = vmatprep.subr.mxu0 0.0
        %764 = vmatpush1.msra.mxu0 0.0
        %765 = vmatprep.subr.mxu0 0.0
        %766 = vmatpush1.msra.mxu0 0.0
        %767 = vmatprep.subr.mxu0 0.0
        %768 = vmatpush1.msra.mxu0 0.0
        %769 = vmatprep.subr.mxu0 0.0
        %770 = vmatpush1.msra.mxu0 0.0
        %771 = vmatprep.subr.mxu0 0.0
        %772 = vmatpush1.msra.mxu0 0.0
        %773 = vmatprep.subr.mxu0 0.0
        %774 = vmatpush1.msra.mxu0 0.0
        %775 = vmatprep.subr.mxu0 0.0
        %776 = vmatpush1.msra.mxu0 0.0
        %777 = vmatprep.subr.mxu0 0.0
        %778 = vmatpush1.msra.mxu0 0.0
        %779 = vmatprep.subr.mxu0 0.0
        %780 = vmatpush1.msra.mxu0 0.0
        %781 = vmatprep.subr.mxu0 0.0
        %782 = vmatpush1.msra.mxu0 0.0
        %783 = vmatprep.subr.mxu0 0.0
        %784 = vmatpush1.msra.mxu0 0.0
        %785 = vmatprep.subr.mxu0 0.0
        %786 = vmatpush1.msra.mxu0 0.0
        %787 = vmatprep.subr.mxu0 0.0
        %788 = vmatpush1.msra.mxu0 0.0
        %789 = vmatprep.subr.mxu0 0.0
        %790 = vmatpush1.msra.mxu0 0.0
        %791 = vmatprep.subr.mxu0 0.0
        %792 = vmatpush1.msra.mxu0 0.0
        %793 = vmatprep.mubr.f32.mxu0 0.0
        %794 = vmatmul.mubr.f32.gmra.mrb[0].mxu0 %v704
        %v795 = vpop.f32.mrb[0].mxu0
        %v796 = vadd.f32 %v727, %v795
        %v797 = vpop.f32.mrb[0].mxu0
        %798 = vmatprep.mubr.f32.mxu0 0.0
        %799 = vmatmul.mubr.f32.gmra.mrb[0].mxu0 %v705
        %v800 = vpop.f32.mrb[0].mxu0
        %v801 = vadd.f32 %v727, %v800
        %v802 = vpop.f32.mrb[0].mxu0
        %803 = vdwg.mxu0
        %v804 = vxor.u32 %v796, 2147483648
        %v805 = vxor.u32 %v801, 2147483648
        %v806 = vmul.f32 %v804, 1.442695
        %v807 = vpow.pop %v806
        %v808 = vmul.f32 %v805, 1.442695
        %v809 = vpow.pop %v808
        %v810 = vadd.f32 %v807, 1.0
        %v811 = vadd.f32 %v809, 1.0
        %v812 = vrcp.pop %v810
        %v813 = vmul.f32 1.0, %v812
        %v814 = vrcp.pop %v811
        %v815 = vmul.f32 1.0, %v814
        %s816 = smul.u32 %s31, 16
        %v817 = vpack.c.bf16 %v705, %v704
        %s818 = sshra.s32 %s816, 4
        %s819 = sand.u32 %s816, 15
        %s820 = smul.addr %s818, 8
        %s821 = scalar_lea.vmem [#allocation2], %s820
        %822 = vst [vmem:[%s821] sm:$0xff] %v817
        %v823 = vmul.f32 %v813, %v700
        %v824 = vmul.f32 %v815, %v701
        %v825 = vpack.c.bf16 %v824, %v823
        %s826 = smul.addr %s818, 8
        %s827 = scalar_lea.vmem [#allocation3], %s826
        %828 = vst [vmem:[%s827] sm:$0xff] %v825
        %829 = vst [vmem:[%s346] sm:$0xff] %v704
        %830 = vst [vmem:[%s346 + $0x8] sm:$0xff] %v705
        %s831 = sand.u32 %s167, 1
        %s832 = scalar_lea.sflag [#allocation6], %s831
        %s833 = sand.u32 %s167, 1
        %s834 = smul.addr %s833, 16
        %s835 = scalar_lea.vmem [#allocation13], %s834
        // Predicated region
        $region65: #{tpu_custom_call.1} parent=39 // pred_check
          %p836 = pneg %p177
        $region66: #{tpu_custom_call.1} parent=39 // pred_check_branch
          %838 = sbr.rel (%p836) target = $region68
        $region67: #{tpu_custom_call.1} parent=39 // pred_region
          %s839 = smul.u32 2, %s31
          %s841 = ssub.s32 256, 256
          %842 = vsyncadd %s832, %s841
          %s843 = smul.addr %s30, 6
          %s844 = sadd.s32 %s839, %s843
          %s845 = smul.addr %s844, 128
          %s846 = scalar_lea.hbm %s5, %s845
          %s847 = sshll.u32 %s835, 4
          %s848 = int_to_ptr.vmem [resolvable:$true] %s847
          %853 = dma.vmem_to_hbm [thread:$0]  %s848, 256, %s846, %s832, 128, 128, 8
        $region68: #{tpu_custom_call.1} parent=39 // pred_fallthru
          _
      $region40: #{tpu_custom_call.1} parent=5 // pred_fallthru
        _
      %p854 = scmp.le.s32.totalorder 2, %s21
      // Predicated region
      $region69: #{tpu_custom_call.1} parent=5 // pred_check
        %p855 = pneg %p854
      $region70: #{tpu_custom_call.1} parent=5 // pred_check_branch
        %857 = sbr.rel (%p855) target = $region72
      $region71: #{tpu_custom_call.1} parent=5 // pred_region
        %s858 = ssub.s32 %s21, 2
        // Predicated region
        $region73: #{tpu_custom_call.1} parent=71 // pred_check
          %p859 = pneg %p183
        $region74: #{tpu_custom_call.1} parent=71 // pred_check_branch
          %861 = sbr.rel (%p859) target = $region76
        $region75: #{tpu_custom_call.1} parent=71 // pred_region
          %s862 = sand.u32 %s168, 1
          %s863 = scalar_lea.sflag [#allocation6], %s862
          %s864 = sand.u32 %s168, 1
          %s865 = smul.addr %s864, 16
          %s866 = scalar_lea.vmem [#allocation13], %s865
          %867 = dma.done %s863, 256
        $region76: #{tpu_custom_call.1} parent=71 // pred_fallthru
          _
      $region72: #{tpu_custom_call.1} parent=5 // pred_fallthru
        _
    $region6: #{tpu_custom_call.1} parent=1 // loop_footer
      %s25 = sadd.s32 1, %s21
    $region7: #{tpu_custom_call.1} parent=1 // loop_footer_branch
      %20 = sbr.rel target = $region3
    $region8: #{tpu_custom_call.1} parent=1 // loop_exit
      _
    %868 = vsyncpa [#allocation5], 1
    %s869 = scalar_lea.sflag [#allocation5], 1
    %870 = vsyncpa %s869, 1
    %871 = vsyncpa [#allocation8], 1
    %s872 = scalar_lea.sflag [#allocation8], 1
    %873 = vsyncpa %s872, 1
    %874 = vsyncpa [#allocation11], 1
    %875 = vsyncpa [#allocation6], 1
    %s876 = scalar_lea.sflag [#allocation6], 1
    %877 = vsyncpa %s876, 1

</llo_original>
